<compile_context>
chip_gen: v7x
topology: tpu7x:2x2x1
jax: 0.10.0
libtpu: 0.0.40
codegen_flags: <defaults>
</compile_context>

<pallas_src>
import jax
import jax.numpy as jnp
from jax.experimental import pallas as pl
from jax.experimental.pallas import tpu as pltpu


def _conv_matmul_kernel(x_ref, w_ref, b_ref, o_ref):
    # x_ref: (1, tM, Kpad) bf16   im2col patch rows for this tile
    # w_ref: (Kpad, Cpad)  bf16   reshaped conv weight (VMEM-resident)
    # b_ref: (1, Cpad)     f32    bias (VMEM-resident)
    # o_ref: (1, tM, Cpad) f32    lane-dense output tile
    acc = jnp.dot(x_ref[0], w_ref[...], preferred_element_type=jnp.float32)
    o_ref[0] = acc + b_ref[...]          # f32 bias add, f32 store


def _round_up(x, m):
    return (x + m - 1) // m * m


def _pick_row_tile(m):
    # Largest "nice" (multiple-of-8) tile that cleanly divides m and leaves
    # more than one grid step; fall back to the full extent.
    for t in (512, 256, 128, 64, 32, 16, 8):
        if t < m and m % t == 0:
            return t
    return m


def conv_layer_forward(x_nchw, weight_oihw, bias, *, k=3, padding=None,
                       stride=1, dilation=1, groups=1):
    """Forward pass matching nn.Conv2d(in, out, k, stride, padding, dilation, groups, bias)."""
    if padding is None:
        padding = k // 2
    # TODO(synk): stride/dilation/groups != 1 not implemented in this kernel.
    assert stride == 1 and dilation == 1 and groups == 1

    n, cin, h, w = x_nchw.shape
    cout = weight_oihw.shape[0]
    # True output size (handles even k too, not just 'same' odd-k convs).
    h_out = h + 2 * padding - dilation * (k - 1)
    w_out = w + 2 * padding - dilation * (k - 1)

    # ---- plain-JAX glue: NCHW -> NHWC, spatial zero-pad, im2col ------------
    x_nhwc = jnp.transpose(x_nchw, (0, 2, 3, 1))
    x_pad = jnp.pad(x_nhwc, ((0, 0), (padding, padding), (padding, padding), (0, 0)))

    cols = [x_pad[:, kh:kh + h_out, kw:kw + w_out, :]
            for kh in range(k) for kw in range(k)]
    patches = jnp.concatenate(cols, axis=-1)            # (N, Ho, Wo, k*k*Cin)

    kkc = k * k * cin
    m = h_out * w_out
    kpad = _round_up(kkc, 128)        # lane-dense contraction axis
    cpad = _round_up(cout, 128)       # lane-dense output-channel axis

    patches = patches.reshape(n, m, kkc)
    patches = jnp.pad(patches, ((0, 0), (0, 0), (0, kpad - kkc)))
    patches = patches.astype(jnp.bfloat16)

    # Weight (O, I, kH, kW) -> (kH, kW, I, O) -> (k*k*Cin, Cout), padded.
    w_mat = jnp.transpose(weight_oihw, (2, 3, 1, 0)).reshape(kkc, cout)
    w_mat = jnp.pad(w_mat, ((0, kpad - kkc), (0, cpad - cout))).astype(jnp.bfloat16)

    if bias is None:
        bias = jnp.zeros((cout,), jnp.float32)
    b_mat = jnp.pad(bias.astype(jnp.float32), (0, cpad - cout)).reshape(1, cpad)

    tm = _pick_row_tile(m)

    out = pl.pallas_call(
        _conv_matmul_kernel,
        out_shape=jax.ShapeDtypeStruct((n, m, cpad), jnp.float32),
        grid=(n, m // tm),
        in_specs=[
            pl.BlockSpec((1, tm, kpad), lambda b, i: (b, i, 0)),
            pl.BlockSpec((kpad, cpad), lambda b, i: (0, 0)),   # resident weight
            pl.BlockSpec((1, cpad), lambda b, i: (0, 0)),      # resident bias
        ],
        out_specs=pl.BlockSpec((1, tm, cpad), lambda b, i: (b, i, 0)),
        compiler_params=pltpu.CompilerParams(
            dimension_semantics=("parallel", "parallel")),
    )(patches, w_mat, b_mat)

    # Drop channel padding, restore NCHW to match PyTorch convention.
    out = out[:, :, :cout].reshape(n, h_out, w_out, cout)
    return jnp.transpose(out, (0, 3, 1, 2)).astype(x_nchw.dtype)


if __name__ == "__main__":
    # Module config: ConvLayer(in_channels=4, out_channels=8) with defaults
    # (k=3, padding=1, stride=1, dilation=1, groups=1, bias=True).
    in_channels, out_channels, k = 4, 8, 3
    batch, spatial = 2, 16

    key = jax.random.PRNGKey(0)
    kx, kw_, kb = jax.random.split(key, 3)

    x = jax.random.normal(kx, (batch, in_channels, spatial, spatial), jnp.float32)
    fan_in = in_channels * k * k
    bound = 1.0 / (fan_in ** 0.5)
    weight = jax.random.uniform(kw_, (out_channels, in_channels, k, k),
                                jnp.float32, -bound, bound)
    bias = jax.random.uniform(kb, (out_channels,), jnp.float32, -bound, bound)

    out = conv_layer_forward(x, weight, bias, k=k)
    out = jax.block_until_ready(out)

    # Reference: XLA conv with identical bf16-input / f32-accumulate precision.
    ref = jax.lax.conv_general_dilated(
        x.astype(jnp.bfloat16), weight.astype(jnp.bfloat16),
        window_strides=(1, 1), padding=((k // 2, k // 2), (k // 2, k // 2)),
        dimension_numbers=("NCHW", "OIHW", "NCHW"),
        preferred_element_type=jnp.float32)
    ref = ref + bias.reshape(1, out_channels, 1, 1)

    assert out.shape == (batch, out_channels, spatial, spatial)
    assert jnp.allclose(out, ref, atol=2e-3, rtol=2e-3), "mismatch vs reference conv"
    print("KERNEL_OK")
</pallas_src>

<mosaic_0001>
module attributes {stable_mosaic.version = 11 : i64} {
  func.func @_conv_matmul_kernel(%arg0: i32, %arg1: i32, %arg2: memref<1x128x128xbf16, #tpu.memory_space<vmem>>, %arg3: memref<128x128xbf16, #tpu.memory_space<vmem>>, %arg4: memref<1x128xf32, #tpu.memory_space<vmem>>, %arg5: memref<1x128x128xf32, #tpu.memory_space<vmem>>) attributes {dimension_semantics = [#tpu.dimension_semantics<parallel>, #tpu.dimension_semantics<parallel>], iteration_bounds = array<i64: 2, 2>, scalar_prefetch = 0 : i64, scratch_operands = 0 : i64, tpu.core_type = #tpu.core_type<tc>, window_params = [{transform_indices = @transform_0, window_bounds = array<i64: 1, 128, 128>}, {pipeline_mode = #tpu.pipeline_mode<synchronous>, transform_indices = @transform_1, window_bounds = array<i64: 128, 128>}, {pipeline_mode = #tpu.pipeline_mode<synchronous>, transform_indices = @transform_2, window_bounds = array<i64: 1, 128>}, {transform_indices = @transform_3, window_bounds = array<i64: 1, 128, 128>}]} {
    %c0 = arith.constant 0 : index
    %c0_0 = arith.constant 0 : index
    %c0_1 = arith.constant 0 : index
    %0 = vector.load %arg2[%c0, %c0_0, %c0_1] : memref<1x128x128xbf16, #tpu.memory_space<vmem>>, vector<1x128x128xbf16>
    %1 = vector.shape_cast %0 : vector<1x128x128xbf16> to vector<128x128xbf16>
    %c0_2 = arith.constant 0 : index
    %c0_3 = arith.constant 0 : index
    %2 = vector.load %arg3[%c0_2, %c0_3] : memref<128x128xbf16, #tpu.memory_space<vmem>>, vector<128x128xbf16>
    %cst = arith.constant dense<0.000000e+00> : vector<128x128xf32>
    %3 = tpu.matmul %1, %2, %cst {dimension_numbers = #tpu.dot_dimension_numbers<[1], [0], [0], [1], [0, 0, 1, 1], [], []>} : vector<128x128xbf16>, vector<128x128xbf16>, vector<128x128xf32> -> vector<128x128xf32>
    %c0_4 = arith.constant 0 : index
    %c0_5 = arith.constant 0 : index
    %4 = vector.load %arg4[%c0_4, %c0_5] : memref<1x128xf32, #tpu.memory_space<vmem>>, vector<1x128xf32>
    %5 = vector.broadcast %4 : vector<1x128xf32> to vector<128x128xf32>
    %6 = arith.addf %3, %5 : vector<128x128xf32>
    %c0_6 = arith.constant 0 : index
    %c0_7 = arith.constant 0 : index
    %c0_8 = arith.constant 0 : index
    %7 = vector.load %arg5[%c0_6, %c0_7, %c0_8] : memref<1x128x128xf32, #tpu.memory_space<vmem>>, vector<1x128x128xf32>
    %8 = vector.shape_cast %7 : vector<1x128x128xf32> to vector<128x128xf32>
    %9 = vector.shape_cast %6 : vector<128x128xf32> to vector<1x128x128xf32>
    tpu.vector_store %arg5[%c0_6, %c0_7, %c0_8], %9 {strides = array<i32>} : memref<1x128x128xf32, #tpu.memory_space<vmem>>, vector<1x128x128xf32>,
    return
  }
  func.func @transform_0(%arg0: i32, %arg1: i32) -> (i32, i32, i32) {
    %c0_i32 = arith.constant 0 : i32
    %c0_i32_0 = arith.constant 0 : i32
    return %arg0, %arg1, %c0_i32 : i32, i32, i32
  }
  func.func @transform_1(%arg0: i32, %arg1: i32) -> (i32, i32) {
    %c0_i32 = arith.constant 0 : i32
    %c0_i32_0 = arith.constant 0 : i32
    %c0_i32_1 = arith.constant 0 : i32
    return %c0_i32, %c0_i32_0 : i32, i32
  }
  func.func @transform_2(%arg0: i32, %arg1: i32) -> (i32, i32) {
    %c0_i32 = arith.constant 0 : i32
    %c0_i32_0 = arith.constant 0 : i32
    %c0_i32_1 = arith.constant 0 : i32
    return %c0_i32, %c0_i32_0 : i32, i32
  }
  func.func @transform_3(%arg0: i32, %arg1: i32) -> (i32, i32, i32) {
    %c0_i32 = arith.constant 0 : i32
    %c0_i32_0 = arith.constant 0 : i32
    return %arg0, %arg1, %c0_i32 : i32, i32, i32
  }
}

</mosaic_0001>

<llo_original>
// kernel: tpu_custom_call.1
$region0: #{tpu_custom_call.1}
  #allocation0 [shape = 'u32[]', space=smem, size = 0x4, offset = 0x4, fixed_abs, tag = 'smem constant byte address 0x4 - core index']
  #allocation1 [shape = 'u32[144,128]{1,0:T(1,128)}', space=vmem, size = 0x12000, scoped, tag = 'internal scratch']
  %s0 = inlined_call_operand.hbm [shape: bf16[2,256,128], index: 0, kind: input, shape index: {}]
  %s1 = inlined_call_operand.hbm [shape: bf16[128,128], index: 1, kind: input, shape index: {}]
  %s2 = inlined_call_operand.vmem [shape: f32[1,128], index: 2, kind: input, shape index: {}]
  %s3 = inlined_call_operand.hbm [shape: f32[2,256,128], index: 3, kind: output, shape index: {}]
  %s4 = sld [smem:[#allocation0]]
  $region53: #{tpu_custom_call.1} parent=0
    _
  %s6 = ssub.s32 1, %s4
  %s7 = scalar_select 0, %s6, %s4
  $region1: #{tpu_custom_call.1} parent=0
    #allocation2 [shape = 'u8[65536]{0}', space=vmem, size = 0x10000, scoped, tag = 'input window, operand 0']
    #allocation3 [shape = 's32[2]{0}', space=sflag, size = 0x8, scoped, tag = 'scoped memory for tpu_custom_call.1']
    #allocation4 [shape = 's32[2]{0}', space=sflag, size = 0x8, scoped, tag = 'scoped memory for tpu_custom_call.1']
    #allocation5 [shape = 'u8[32768]{0}', space=vmem, size = 0x8000, scoped, tag = 'input window, operand 1, single buffered']
    #allocation6 [shape = 's32[1]{0}', space=sflag, size = 0x4, scoped, tag = 'scoped memory for tpu_custom_call.1']
    #allocation7 [shape = 'u8[131072]{0}', space=vmem, size = 0x20000, scoped, tag = 'output window, operand 0']
    %8 = vsyncpa [#allocation3], 0
    %s9 = scalar_lea.sflag [#allocation3], 1
    %10 = vsyncpa %s9, 0
    %11 = vsyncpa [#allocation6], 0
    %12 = vsyncpa [#allocation4], 0
    %s13 = scalar_lea.sflag [#allocation4], 1
    %14 = vsyncpa %s13, 0
    loop: start=0, step=1, limit=6
    $region2: #{tpu_custom_call.1} parent=1 // loop_pre_header
      _
    $region3: #{tpu_custom_call.1} parent=1 // loop_header
      %s16 = sphi 0, %s20
      %p17 = scmp.ge.s32.totalorder %s16, 6
      %s23 = sphi 0, %s35
      %s24 = sphi 0, %s31
      %s25 = sphi 0, %s23
      %s26 = sphi 0, %s24
      %s27 = sphi 0, %s25
      %s28 = sphi 0, %s26
      %s40 = sphi 0, %s42
      %s43 = sphi 0, %s40
      %s44 = sphi 0, %s43
      %s60 = sphi 0, %s44
      %s64 = sphi 0, %s64
      %s66 = sphi 0, %s64
      %s67 = sphi 0, %s66
      %s81 = sphi 0, %s67
      %s85 = sphi 0, %s85
      %s87 = sphi 0, %s85
      %s88 = sphi 0, %s87
      %s102 = sphi 0, %s88
      %s110 = sphi 0, %s112
      %s113 = sphi 0, %s110
      %s114 = sphi 0, %s113
      %s130 = sphi 0, %s114
    $region4: #{tpu_custom_call.1} parent=1 // loop_header_branch
      %19 = sbr.rel (%p17) target = $region8
    $region5: #{tpu_custom_call.1} parent=1 // loop_body
      %s21 = ssub.s32 %s16, 1
      %s22 = ssub.s32 %s16, 2
      %s29 = sadd.s32 1, %s24
      %p30 = scmp.ge.s32.totalorder %s29, 2
      %s31 = scalar_select %p30, 0, %s29
      %s32 = sadd.s32 1, %s23
      %s33 = scalar_select %p30, %s32, %s23
      %p34 = scmp.ge.s32.totalorder %s33, 2
      %s35 = scalar_select %p34, 0, %s33
      %s36 = ssub.s32 %s23, %s35
      %s37 = ssub.s32 %s24, %s31
      %s38 = sor.u32 %s36, %s37
      %p39 = scmp.eq.s32.totalorder %s38, 0
      %s41 = sadd.s32 %s40, 1
      %s42 = scalar_select %p39, %s40, %s41
      %p45 = pneg %p39
      %p46 = scmp.eq.s32.totalorder %s16, 3
      %p47 = por %p45, %p46
      %p48 = scmp.ne.s32.totalorder %s40, %s43
      %p49 = scmp.eq.s32.totalorder %s16, 0
      %p50 = por %p48, %p49
      %p51 = scmp.ne.s32.totalorder %s40, %s43
      %p52 = scmp.eq.s32.totalorder %s21, 3
      %p53 = por %p51, %p52
      %p54 = scmp.ne.s32.totalorder %s43, %s44
      %p55 = scmp.eq.s32.totalorder %s21, 0
      %p56 = por %p54, %p55
      %p57 = scmp.ne.s32.totalorder %s43, %s44
      %p58 = scmp.eq.s32.totalorder %s22, 3
      %p59 = por %p57, %p58
      %p61 = scmp.ne.s32.totalorder %s44, %s60
      %p62 = scmp.eq.s32.totalorder %s22, 0
      %p63 = por %p61, %p62
      %s65 = sadd.s32 %s64, 1
      %p68 = scmp.eq.s32.totalorder %s16, 3
      %p69 = scmp.ne.s32.totalorder %s64, %s66
      %p70 = scmp.eq.s32.totalorder %s16, 0
      %p71 = por %p69, %p70
      %p72 = scmp.ne.s32.totalorder %s64, %s66
      %p73 = scmp.eq.s32.totalorder %s21, 3
      %p74 = por %p72, %p73
      %p75 = scmp.ne.s32.totalorder %s66, %s67
      %p76 = scmp.eq.s32.totalorder %s21, 0
      %p77 = por %p75, %p76
      %p78 = scmp.ne.s32.totalorder %s66, %s67
      %p79 = scmp.eq.s32.totalorder %s22, 3
      %p80 = por %p78, %p79
      %p82 = scmp.ne.s32.totalorder %s67, %s81
      %p83 = scmp.eq.s32.totalorder %s22, 0
      %p84 = por %p82, %p83
      %s86 = sadd.s32 %s85, 1
      %p89 = scmp.eq.s32.totalorder %s16, 3
      %p90 = scmp.ne.s32.totalorder %s85, %s87
      %p91 = scmp.eq.s32.totalorder %s16, 0
      %p92 = por %p90, %p91
      %p93 = scmp.ne.s32.totalorder %s85, %s87
      %p94 = scmp.eq.s32.totalorder %s21, 3
      %p95 = por %p93, %p94
      %p96 = scmp.ne.s32.totalorder %s87, %s88
      %p97 = scmp.eq.s32.totalorder %s21, 0
      %p98 = por %p96, %p97
      %p99 = scmp.ne.s32.totalorder %s87, %s88
      %p100 = scmp.eq.s32.totalorder %s22, 3
      %p101 = por %p99, %p100
      %p103 = scmp.ne.s32.totalorder %s88, %s102
      %p104 = scmp.eq.s32.totalorder %s22, 0
      %p105 = por %p103, %p104
      %s106 = ssub.s32 %s23, %s35
      %s107 = ssub.s32 %s24, %s31
      %s108 = sor.u32 %s106, %s107
      %p109 = scmp.eq.s32.totalorder %s108, 0
      %s111 = sadd.s32 %s110, 1
      %s112 = scalar_select %p109, %s110, %s111
      %p115 = pneg %p109
      %p116 = scmp.eq.s32.totalorder %s16, 3
      %p117 = por %p115, %p116
      %p118 = scmp.ne.s32.totalorder %s110, %s113
      %p119 = scmp.eq.s32.totalorder %s16, 0
      %p120 = por %p118, %p119
      %p121 = scmp.ne.s32.totalorder %s110, %s113
      %p122 = scmp.eq.s32.totalorder %s21, 3
      %p123 = por %p121, %p122
      %p124 = scmp.ne.s32.totalorder %s113, %s114
      %p125 = scmp.eq.s32.totalorder %s21, 0
      %p126 = por %p124, %p125
      %p127 = scmp.ne.s32.totalorder %s113, %s114
      %p128 = scmp.eq.s32.totalorder %s22, 3
      %p129 = por %p127, %p128
      %p131 = scmp.ne.s32.totalorder %s114, %s130
      %p132 = scmp.eq.s32.totalorder %s22, 0
      %p133 = por %p131, %p132
      %p134 = scmp.le.s32.totalorder 1, %s16
      %p135 = scmp.lt.s32.totalorder %s16, 5
      %p136 = pnand %p134, %p135
      %p137 = pneg %p136
      // Predicated region
      $region9: #{tpu_custom_call.1} parent=5 // pred_check
        _
      $region10: #{tpu_custom_call.1} parent=5 // pred_check_branch
        %139 = sbr.rel (%p136) target = $region12
      $region11: #{tpu_custom_call.1} parent=5 // pred_region
        %s140 = ssub.s32 %s16, 1
        // Predicated region
        $region13: #{tpu_custom_call.1} parent=11 // pred_check
          %p141 = pneg %p77
        $region14: #{tpu_custom_call.1} parent=11 // pred_check_branch
          %143 = sbr.rel (%p141) target = $region16
        $region15: #{tpu_custom_call.1} parent=11 // pred_region
          %s145 = ssub.s32 1024, 1024
          %146 = vsyncadd [#allocation6], %s145
          %s147 = sshll.u32 [#allocation5], 4
          %s148 = int_to_ptr.vmem [resolvable:$true] %s147
          %153 = dma.hbm_to_vmem [thread:$0]  %s1, 1024, %s148, [#allocation6], 64, 64, 4
        $region16: #{tpu_custom_call.1} parent=11 // pred_fallthru
          _
        // Predicated region
        $region17: #{tpu_custom_call.1} parent=11 // pred_check
          %p154 = pneg %p98
        $region18: #{tpu_custom_call.1} parent=11 // pred_check_branch
          %156 = sbr.rel (%p154) target = $region20
        $region19: #{tpu_custom_call.1} parent=11 // pred_region
          _
        $region20: #{tpu_custom_call.1} parent=11 // pred_fallthru
          _
      $region12: #{tpu_custom_call.1} parent=5 // pred_fallthru
        _
      %p157 = scmp.lt.s32.totalorder %s16, 4
      // Predicated region
      $region21: #{tpu_custom_call.1} parent=5 // pred_check
        %p158 = pneg %p157
      $region22: #{tpu_custom_call.1} parent=5 // pred_check_branch
        %160 = sbr.rel (%p158) target = $region24
      $region23: #{tpu_custom_call.1} parent=5 // pred_region
        // Predicated region
        $region25: #{tpu_custom_call.1} parent=23 // pred_check
          %p161 = pneg %p50
        $region26: #{tpu_custom_call.1} parent=23 // pred_check_branch
          %163 = sbr.rel (%p161) target = $region28
        $region27: #{tpu_custom_call.1} parent=23 // pred_region
          %s164 = sand.u32 %s40, 1
          %s165 = scalar_lea.sflag [#allocation3], %s164
          %s166 = sand.u32 %s40, 1
          %s167 = smul.addr %s166, 64
          %s168 = scalar_lea.vmem [#allocation2], %s167
          %s169 = smul.u32 16, %s24
          %s171 = ssub.s32 1024, 1024
          %172 = vsyncadd %s165, %s171
          %s173 = smul.addr %s23, 32
          %s174 = sadd.s32 %s169, %s173
          %s175 = smul.addr %s174, 64
          %s176 = scalar_lea.hbm %s0, %s175
          %s177 = sshll.u32 %s168, 4
          %s178 = int_to_ptr.vmem [resolvable:$true] %s177
          %183 = dma.hbm_to_vmem [thread:$0]  %s176, 1024, %s178, %s165, 64, 64, 4
        $region28: #{tpu_custom_call.1} parent=23 // pred_fallthru
          _
      $region24: #{tpu_custom_call.1} parent=5 // pred_fallthru
        _
      %p184 = scmp.le.s32.totalorder 1, %s16
      %p185 = scmp.lt.s32.totalorder %s16, 5
      %p186 = pnand %p184, %p185
      %p187 = pneg %p186
      // Predicated region
      $region29: #{tpu_custom_call.1} parent=5 // pred_check
        _
      $region30: #{tpu_custom_call.1} parent=5 // pred_check_branch
        %189 = sbr.rel (%p186) target = $region32
      $region31: #{tpu_custom_call.1} parent=5 // pred_region
        %s190 = ssub.s32 %s16, 1
        %s191 = sand.u32 %s43, 1
        %s192 = scalar_lea.sflag [#allocation3], %s191
        %s193 = sand.u32 %s43, 1
        %s194 = smul.addr %s193, 64
        %s195 = scalar_lea.vmem [#allocation2], %s194
        // Predicated region
        $region33: #{tpu_custom_call.1} parent=31 // pred_check
          %p196 = pneg %p56
        $region34: #{tpu_custom_call.1} parent=31 // pred_check_branch
          %198 = sbr.rel (%p196) target = $region36
        $region35: #{tpu_custom_call.1} parent=31 // pred_region
          %199 = dma.done %s192, 1024
        $region36: #{tpu_custom_call.1} parent=31 // pred_fallthru
          _
        // Predicated region
        $region37: #{tpu_custom_call.1} parent=31 // pred_check
          %p200 = pneg %p77
        $region38: #{tpu_custom_call.1} parent=31 // pred_check_branch
          %202 = sbr.rel (%p200) target = $region40
        $region39: #{tpu_custom_call.1} parent=31 // pred_region
          %203 = dma.done [#allocation6], 1024
        $region40: #{tpu_custom_call.1} parent=31 // pred_fallthru
          _
        %s204 = sand.u32 %s43, 1
        %s205 = scalar_lea.sflag [#allocation3], %s204
        %s206 = sand.u32 %s43, 1
        %s207 = smul.addr %s206, 64
        %s208 = scalar_lea.vmem [#allocation2], %s207
        %p209 = pneg %p56
        %p210 = pneg %p53
        %p211 = pneg %p77
        %p212 = pneg %p74
        %p213 = pneg %p98
        %p214 = pneg %p95
        %p215 = pneg %p126
        %p216 = pneg %p123
        %s217 = sand.u32 %s113, 1
        %s218 = scalar_lea.sflag [#allocation4], %s217
        %s219 = sand.u32 %s113, 1
        %s220 = smul.addr %s219, 128
        %s221 = scalar_lea.vmem [#allocation7], %s220
        %s222 = smul.u32 16, %s26
        %s223 = smul.u32 16, %s26
        %v225 = vld [vmem:[%s195] sm:$0xf]
        %v226 = vld [vmem:[%s195 + $0x4] sm:$0xf]
        %v227 = vld [vmem:[%s195 + $0x8] sm:$0xf]
        %v228 = vld [vmem:[%s195 + $0xc] sm:$0xf]
        %v229 = vld [vmem:[%s195 + $0x10] sm:$0xf]
        %v230 = vld [vmem:[%s195 + $0x14] sm:$0xf]
        %v231 = vld [vmem:[%s195 + $0x18] sm:$0xf]
        %v232 = vld [vmem:[%s195 + $0x1c] sm:$0xf]
        %v233 = vld [vmem:[%s195 + $0x20] sm:$0xf]
        %v234 = vld [vmem:[%s195 + $0x24] sm:$0xf]
        %v235 = vld [vmem:[%s195 + $0x28] sm:$0xf]
        %v236 = vld [vmem:[%s195 + $0x2c] sm:$0xf]
        %v237 = vld [vmem:[%s195 + $0x30] sm:$0xf]
        %v238 = vld [vmem:[%s195 + $0x34] sm:$0xf]
        %v239 = vld [vmem:[%s195 + $0x38] sm:$0xf]
        %v240 = vld [vmem:[%s195 + $0x3c] sm:$0xf]
        %v241 = vld [vmem:[#allocation5] sm:$0xf]
        %v242 = vld [vmem:[#allocation5 + $0x4] sm:$0xf]
        %v243 = vld [vmem:[#allocation5 + $0x8] sm:$0xf]
        %v244 = vld [vmem:[#allocation5 + $0xc] sm:$0xf]
        %v245 = vld [vmem:[#allocation5 + $0x10] sm:$0xf]
        %v246 = vld [vmem:[#allocation5 + $0x14] sm:$0xf]
        %v247 = vld [vmem:[#allocation5 + $0x18] sm:$0xf]
        %v248 = vld [vmem:[#allocation5 + $0x1c] sm:$0xf]
        %v249 = vld [vmem:[#allocation5 + $0x20] sm:$0xf]
        %v250 = vld [vmem:[#allocation5 + $0x24] sm:$0xf]
        %v251 = vld [vmem:[#allocation5 + $0x28] sm:$0xf]
        %v252 = vld [vmem:[#allocation5 + $0x2c] sm:$0xf]
        %v253 = vld [vmem:[#allocation5 + $0x30] sm:$0xf]
        %v254 = vld [vmem:[#allocation5 + $0x34] sm:$0xf]
        %v255 = vld [vmem:[#allocation5 + $0x38] sm:$0xf]
        %v256 = vld [vmem:[#allocation5 + $0x3c] sm:$0xf]
        %v257 = vld [vmem:[%s2] sm:$0x1]
        %v259 = vlaneseq
        %v260 = vshrl.u32 %v259, 7
        %v261 = vsub.s32 0, %v260
        %v262 = vrot.slane %v257, %v261
        %v280 = vunpack.c.l.b16 %v225
        %v281 = vunpack.c.l.b16 %v226
        %v282 = vunpack.c.l.b16 %v227
        %v283 = vunpack.c.l.b16 %v228
        %v284 = vunpack.c.l.b16 %v229
        %v285 = vunpack.c.l.b16 %v230
        %v286 = vunpack.c.l.b16 %v231
        %v287 = vunpack.c.l.b16 %v232
        %v288 = vunpack.c.l.b16 %v233
        %v289 = vunpack.c.l.b16 %v234
        %v290 = vunpack.c.l.b16 %v235
        %v291 = vunpack.c.l.b16 %v236
        %v292 = vunpack.c.l.b16 %v237
        %v293 = vunpack.c.l.b16 %v238
        %v294 = vunpack.c.l.b16 %v239
        %v295 = vunpack.c.l.b16 %v240
        %v296 = vpack.c.b16 %v281, %v280
        %v297 = vpack.c.b16 %v283, %v282
        %v298 = vpack.c.b16 %v285, %v284
        %v299 = vpack.c.b16 %v287, %v286
        %v300 = vpack.c.b16 %v289, %v288
        %v301 = vpack.c.b16 %v291, %v290
        %v302 = vpack.c.b16 %v293, %v292
        %v303 = vpack.c.b16 %v295, %v294
        %v328 = vunpack.c.l.b16 %v241
        %v329 = vunpack.c.l.b16 %v242
        %v330 = vunpack.c.l.b16 %v243
        %v331 = vunpack.c.l.b16 %v244
        %v332 = vunpack.c.l.b16 %v245
        %v333 = vunpack.c.l.b16 %v246
        %v334 = vunpack.c.l.b16 %v247
        %v335 = vunpack.c.l.b16 %v248
        %v336 = vunpack.c.l.b16 %v249
        %v337 = vunpack.c.l.b16 %v250
        %v338 = vunpack.c.l.b16 %v251
        %v339 = vunpack.c.l.b16 %v252
        %v340 = vunpack.c.l.b16 %v253
        %v341 = vunpack.c.l.b16 %v254
        %v342 = vunpack.c.l.b16 %v255
        %v343 = vunpack.c.l.b16 %v256
        %v344 = vpack.c.b16 %v329, %v328
        %v345 = vpack.c.b16 %v331, %v330
        %v346 = vpack.c.b16 %v333, %v332
        %v347 = vpack.c.b16 %v335, %v334
        %v348 = vpack.c.b16 %v337, %v336
        %v349 = vpack.c.b16 %v339, %v338
        %v350 = vpack.c.b16 %v341, %v340
        %v351 = vpack.c.b16 %v343, %v342
        %360 = vmatprep.subr.bf16.mxu0 0
        %361 = vmatpush1.bf16.msra.mxu0 %v344
        %362 = vmatprep.subr.bf16.mxu0 0
        %363 = vmatpush1.bf16.msra.mxu0 %v345
        %364 = vmatprep.subr.bf16.mxu0 0
        %365 = vmatpush1.bf16.msra.mxu0 %v346
        %366 = vmatprep.subr.bf16.mxu0 0
        %367 = vmatpush1.bf16.msra.mxu0 %v347
        %368 = vmatprep.subr.bf16.mxu0 0
        %369 = vmatpush1.bf16.msra.mxu0 %v348
        %370 = vmatprep.subr.bf16.mxu0 0
        %371 = vmatpush1.bf16.msra.mxu0 %v349
        %372 = vmatprep.subr.bf16.mxu0 0
        %373 = vmatpush1.bf16.msra.mxu0 %v350
        %374 = vmatprep.subr.bf16.mxu0 0
        %375 = vmatpush1.bf16.msra.mxu0 %v351
        %376 = vmatprep.subr.bf16.mxu0 0
        %377 = vmatpush1.bf16.msra.mxu0 0
        %378 = vmatprep.subr.bf16.mxu0 0
        %379 = vmatpush1.bf16.msra.mxu0 0
        %380 = vmatprep.subr.bf16.mxu0 0
        %381 = vmatpush1.bf16.msra.mxu0 0
        %382 = vmatprep.subr.bf16.mxu0 0
        %383 = vmatpush1.bf16.msra.mxu0 0
        %384 = vmatprep.subr.bf16.mxu0 0
        %385 = vmatpush1.bf16.msra.mxu0 0
        %386 = vmatprep.subr.bf16.mxu0 0
        %387 = vmatpush1.bf16.msra.mxu0 0
        %388 = vmatprep.subr.bf16.mxu0 0
        %389 = vmatpush1.bf16.msra.mxu0 0
        %390 = vmatprep.subr.bf16.mxu0 0
        %391 = vmatpush1.bf16.msra.mxu0 0
        %392 = vmatprep.mubr.bf16.mxu0 0
        %393 = vmatmul.mubr.bf16.gmra.mrb[0].mxu0 %v296
        %v394 = vpop.f32.mrb[0].mxu0
        %v395 = vadd.f32 %v262, %v394
        %v396 = vpop.f32.mrb[0].mxu0
        %v397 = vpop.f32.mrb[0].mxu0
        %v398 = vadd.f32 %v262, %v397
        %v399 = vpop.f32.mrb[0].mxu0
        %400 = vmatprep.mubr.bf16.mxu0 0
        %401 = vmatmul.mubr.bf16.gmra.mrb[0].mxu0 %v297
        %v402 = vpop.f32.mrb[0].mxu0
        %v403 = vadd.f32 %v262, %v402
        %v404 = vpop.f32.mrb[0].mxu0
        %v405 = vpop.f32.mrb[0].mxu0
        %v406 = vadd.f32 %v262, %v405
        %v407 = vpop.f32.mrb[0].mxu0
        %408 = vmatprep.mubr.bf16.mxu0 0
        %409 = vmatmul.mubr.bf16.gmra.mrb[0].mxu0 %v298
        %v410 = vpop.f32.mrb[0].mxu0
        %v411 = vadd.f32 %v262, %v410
        %v412 = vpop.f32.mrb[0].mxu0
        %v413 = vpop.f32.mrb[0].mxu0
        %v414 = vadd.f32 %v262, %v413
        %v415 = vpop.f32.mrb[0].mxu0
        %416 = vmatprep.mubr.bf16.mxu0 0
        %417 = vmatmul.mubr.bf16.gmra.mrb[0].mxu0 %v299
        %v418 = vpop.f32.mrb[0].mxu0
        %v419 = vadd.f32 %v262, %v418
        %v420 = vpop.f32.mrb[0].mxu0
        %v421 = vpop.f32.mrb[0].mxu0
        %v422 = vadd.f32 %v262, %v421
        %v423 = vpop.f32.mrb[0].mxu0
        %424 = vmatprep.mubr.bf16.mxu0 0
        %425 = vmatmul.mubr.bf16.gmra.mrb[0].mxu0 %v300
        %v426 = vpop.f32.mrb[0].mxu0
        %v427 = vadd.f32 %v262, %v426
        %v428 = vpop.f32.mrb[0].mxu0
        %v429 = vpop.f32.mrb[0].mxu0
        %v430 = vadd.f32 %v262, %v429
        %v431 = vpop.f32.mrb[0].mxu0
        %432 = vmatprep.mubr.bf16.mxu0 0
        %433 = vmatmul.mubr.bf16.gmra.mrb[0].mxu0 %v301
        %v434 = vpop.f32.mrb[0].mxu0
        %v435 = vadd.f32 %v262, %v434
        %v436 = vpop.f32.mrb[0].mxu0
        %v437 = vpop.f32.mrb[0].mxu0
        %v438 = vadd.f32 %v262, %v437
        %v439 = vpop.f32.mrb[0].mxu0
        %440 = vmatprep.mubr.bf16.mxu0 0
        %441 = vmatmul.mubr.bf16.gmra.mrb[0].mxu0 %v302
        %v442 = vpop.f32.mrb[0].mxu0
        %v443 = vadd.f32 %v262, %v442
        %v444 = vpop.f32.mrb[0].mxu0
        %v445 = vpop.f32.mrb[0].mxu0
        %v446 = vadd.f32 %v262, %v445
        %v447 = vpop.f32.mrb[0].mxu0
        %448 = vmatprep.mubr.bf16.mxu0 0
        %449 = vmatmul.mubr.bf16.gmra.mrb[0].mxu0 %v303
        %v450 = vpop.f32.mrb[0].mxu0
        %v451 = vadd.f32 %v262, %v450
        %v452 = vpop.f32.mrb[0].mxu0
        %v453 = vpop.f32.mrb[0].mxu0
        %v454 = vadd.f32 %v262, %v453
        %v455 = vpop.f32.mrb[0].mxu0
        %456 = vdwg.mxu0
        %457 = vst [vmem:[%s221] sm:$0xff] %v395
        %458 = vst [vmem:[%s221 + $0x8] sm:$0xff] %v398
        %459 = vst [vmem:[%s221 + $0x10] sm:$0xff] %v403
        %460 = vst [vmem:[%s221 + $0x18] sm:$0xff] %v406
        %461 = vst [vmem:[%s221 + $0x20] sm:$0xff] %v411
        %462 = vst [vmem:[%s221 + $0x28] sm:$0xff] %v414
        %463 = vst [vmem:[%s221 + $0x30] sm:$0xff] %v419
        %464 = vst [vmem:[%s221 + $0x38] sm:$0xff] %v422
        %465 = vst [vmem:[%s221 + $0x40] sm:$0xff] %v427
        %466 = vst [vmem:[%s221 + $0x48] sm:$0xff] %v430
        %467 = vst [vmem:[%s221 + $0x50] sm:$0xff] %v435
        %468 = vst [vmem:[%s221 + $0x58] sm:$0xff] %v438
        %469 = vst [vmem:[%s221 + $0x60] sm:$0xff] %v443
        %470 = vst [vmem:[%s221 + $0x68] sm:$0xff] %v446
        %471 = vst [vmem:[%s221 + $0x70] sm:$0xff] %v451
        %472 = vst [vmem:[%s221 + $0x78] sm:$0xff] %v454
        %s473 = sand.u32 %s113, 1
        %s474 = scalar_lea.sflag [#allocation4], %s473
        %s475 = sand.u32 %s113, 1
        %s476 = smul.addr %s475, 128
        %s477 = scalar_lea.vmem [#allocation7], %s476
        // Predicated region
        $region41: #{tpu_custom_call.1} parent=31 // pred_check
          %p478 = pneg %p123
        $region42: #{tpu_custom_call.1} parent=31 // pred_check_branch
          %480 = sbr.rel (%p478) target = $region44
        $region43: #{tpu_custom_call.1} parent=31 // pred_region
          %s481 = smul.u32 16, %s26
          %s483 = ssub.s32 2048, 2048
          %484 = vsyncadd %s474, %s483
          %s485 = smul.addr %s25, 32
          %s486 = sadd.s32 %s481, %s485
          %s487 = smul.addr %s486, 128
          %s488 = scalar_lea.hbm %s3, %s487
          %s489 = sshll.u32 %s477, 4
          %s490 = int_to_ptr.vmem [resolvable:$true] %s489
          %495 = dma.vmem_to_hbm [thread:$0]  %s490, 2048, %s488, %s474, 128, 128, 8
        $region44: #{tpu_custom_call.1} parent=31 // pred_fallthru
          _
      $region32: #{tpu_custom_call.1} parent=5 // pred_fallthru
        _
      %p496 = scmp.le.s32.totalorder 2, %s16
      // Predicated region
      $region45: #{tpu_custom_call.1} parent=5 // pred_check
        %p497 = pneg %p496
      $region46: #{tpu_custom_call.1} parent=5 // pred_check_branch
        %499 = sbr.rel (%p497) target = $region48
      $region47: #{tpu_custom_call.1} parent=5 // pred_region
        %s500 = ssub.s32 %s16, 2
        // Predicated region
        $region49: #{tpu_custom_call.1} parent=47 // pred_check
          %p501 = pneg %p129
        $region50: #{tpu_custom_call.1} parent=47 // pred_check_branch
          %503 = sbr.rel (%p501) target = $region52
        $region51: #{tpu_custom_call.1} parent=47 // pred_region
          %s504 = sand.u32 %s114, 1
          %s505 = scalar_lea.sflag [#allocation4], %s504
          %s506 = sand.u32 %s114, 1
          %s507 = smul.addr %s506, 128
          %s508 = scalar_lea.vmem [#allocation7], %s507
          %509 = dma.done %s505, 2048
        $region52: #{tpu_custom_call.1} parent=47 // pred_fallthru
          _
      $region48: #{tpu_custom_call.1} parent=5 // pred_fallthru
        _
    $region6: #{tpu_custom_call.1} parent=1 // loop_footer
      %s20 = sadd.s32 1, %s16
    $region7: #{tpu_custom_call.1} parent=1 // loop_footer_branch
      %15 = sbr.rel target = $region3
    $region8: #{tpu_custom_call.1} parent=1 // loop_exit
      _
    %510 = vsyncpa [#allocation3], 1
    %s511 = scalar_lea.sflag [#allocation3], 1
    %512 = vsyncpa %s511, 1
    %513 = vsyncpa [#allocation6], 1
    %514 = vsyncpa [#allocation4], 1
    %s515 = scalar_lea.sflag [#allocation4], 1
    %516 = vsyncpa %s515, 1

</llo_original>
